<compile_context>
chip_gen: v7x
topology: tpu7x:2x2x1
jax: 0.10.0
libtpu: 0.0.40
codegen_flags: <defaults>
</compile_context>

<pallas_src>
import jax
import jax.numpy as jnp
from jax.experimental import pallas as pl
from jax.experimental.pallas import tpu as pltpu


def _sq_minus_one_kernel(x_ref, o_ref):
    # VPU elementwise hot path: out = x**2 - 1, computed/stored in f32.
    x = x_ref[...].astype(jnp.float32)
    o_ref[...] = x * x - jnp.float32(1.0)


def pt_module_forward(x):
    """Equivalent of PtModule.forward: returns (x**2 - 1) as float32 with shape (rows, cols)."""
    assert x.ndim == 2, "PtModule semantics require a 2-D input (each x[i, j] is a scalar)."
    rows, cols = x.shape
    in_bytes_per_elem = jnp.dtype(x.dtype).itemsize

    # ---- Row-tile selection: ~3 MiB per f32 output tile, multiple of 8 sublanes. ----
    target_tile_bytes = 3 * 1024 * 1024
    br = max(8, (target_tile_bytes // (cols * 4)) // 8 * 8)
    rows_pad8 = -(-rows // 8) * 8          # rows rounded up to sublane multiple
    br = min(br, rows_pad8)                # never bigger than the (padded) array
    rows_padded = -(-rows // br) * br      # rows rounded up to a whole number of tiles
    grid = (rows_padded // br,)

    # ---- Pad ragged rows in the wrapper (elementwise op => padding is harmless). ----
    if rows_padded != rows:
        x_in = jnp.pad(x, ((0, rows_padded - rows), (0, 0)))
    else:
        x_in = x

    n = rows * cols
    cost = pl.CostEstimate(
        flops=2 * n,
        transcendentals=0,
        bytes_accessed=n * in_bytes_per_elem + n * 4,
    )

    out_padded = pl.pallas_call(
        _sq_minus_one_kernel,
        out_shape=jax.ShapeDtypeStruct((rows_padded, cols), jnp.float32),
        grid=grid,
        # Lane-dense blocks: tile rows only, keep the full column extent.
        in_specs=[pl.BlockSpec((br, cols), lambda i: (i, 0))],
        out_specs=pl.BlockSpec((br, cols), lambda i: (i, 0)),
        compiler_params=pltpu.CompilerParams(
            dimension_semantics=("parallel",),     # shard grid across v7x's 2 TCs
            vmem_limit_bytes=32 * 1024 * 1024,     # covers v5e's 16 MiB scoped default
        ),
        cost_estimate=cost,
    )(x_in)

    if rows_padded != rows:
        out_padded = out_padded[:rows, :]
    return out_padded


if __name__ == "__main__":
    key = jax.random.PRNGKey(0)

    # Shape consistent with the module's (size(0), size(1)) output.
    x = jax.random.normal(key, (8, 128), dtype=jnp.float32)
    out = jax.block_until_ready(pt_module_forward(x))
    ref = x.astype(jnp.float32) ** 2 - 1.0
    assert out.shape == (x.shape[0], x.shape[1])
    assert out.dtype == jnp.float32
    assert jnp.allclose(out, ref, atol=1e-6, rtol=1e-6)

    # Ragged / non-aligned shape exercises the wrapper padding + tail handling.
    key2 = jax.random.PRNGKey(1)
    x2 = jax.random.normal(key2, (13, 96), dtype=jnp.float32)
    out2 = jax.block_until_ready(pt_module_forward(x2))
    ref2 = x2.astype(jnp.float32) ** 2 - 1.0
    assert out2.shape == (13, 96)
    assert jnp.allclose(out2, ref2, atol=1e-6, rtol=1e-6)

    print("KERNEL_OK")
</pallas_src>

<mosaic_0001>
module attributes {stable_mosaic.version = 11 : i64} {
  func.func @_sq_minus_one_kernel(%arg0: i32, %arg1: memref<8x128xf32, #tpu.memory_space<vmem>>, %arg2: memref<8x128xf32, #tpu.memory_space<vmem>>) attributes {dimension_semantics = [#tpu.dimension_semantics<parallel>], iteration_bounds = array<i64: 1>, scalar_prefetch = 0 : i64, scratch_operands = 0 : i64, tpu.core_type = #tpu.core_type<tc>, window_params = [{transform_indices = @transform_0, window_bounds = array<i64: 8, 128>}, {transform_indices = @transform_1, window_bounds = array<i64: 8, 128>}]} {
    %c0 = arith.constant 0 : index
    %c0_0 = arith.constant 0 : index
    %0 = vector.load %arg1[%c0, %c0_0] : memref<8x128xf32, #tpu.memory_space<vmem>>, vector<8x128xf32>
    %1 = arith.mulf %0, %0 : vector<8x128xf32>
    %cst = arith.constant 1.000000e+00 : f32
    %2 = vector.broadcast %cst : f32 to vector<8x128xf32>
    %3 = arith.subf %1, %2 : vector<8x128xf32>
    %c0_1 = arith.constant 0 : index
    %c0_2 = arith.constant 0 : index
    %4 = vector.load %arg2[%c0_1, %c0_2] : memref<8x128xf32, #tpu.memory_space<vmem>>, vector<8x128xf32>
    tpu.vector_store %arg2[%c0_1, %c0_2], %3 {strides = array<i32>} : memref<8x128xf32, #tpu.memory_space<vmem>>, vector<8x128xf32>,
    return
  }
  func.func @transform_0(%arg0: i32) -> (i32, i32) {
    %c0_i32 = arith.constant 0 : i32
    %c0_i32_0 = arith.constant 0 : i32
    return %arg0, %c0_i32 : i32, i32
  }
  func.func @transform_1(%arg0: i32) -> (i32, i32) {
    %c0_i32 = arith.constant 0 : i32
    %c0_i32_0 = arith.constant 0 : i32
    return %arg0, %c0_i32 : i32, i32
  }
}

</mosaic_0001>

<llo_original>
// kernel: tpu_custom_call.1
$region0: #{tpu_custom_call.1}
  #allocation0 [shape = 'u32[]', space=smem, size = 0x4, offset = 0x4, fixed_abs, tag = 'smem constant byte address 0x4 - core index']
  #allocation1 [shape = 'u32[144,128]{1,0:T(1,128)}', space=vmem, size = 0x12000, scoped, tag = 'internal scratch']
  %s0 = inlined_call_operand.hbm [shape: f32[8,128], index: 0, kind: input, shape index: {}]
  %s1 = inlined_call_operand.hbm [shape: f32[8,128], index: 1, kind: output, shape index: {}]
  %s2 = sld [smem:[#allocation0]]
  $region18: #{tpu_custom_call.1} parent=0
    _
  %s4 = ssub.s32 1, %s2
  %s5 = scalar_select 0, %s4, %s2
  $region1: #{tpu_custom_call.1} parent=0
    #allocation2 [shape = 'u8[4096]{0}', space=vmem, size = 0x1000, scoped, tag = 'input window, operand 0, single buffered']
    #allocation3 [shape = 's32[1]{0}', space=sflag, size = 0x4, scoped, tag = 'scoped memory for tpu_custom_call.1']
    #allocation4 [shape = 's32[1]{0}', space=sflag, size = 0x4, scoped, tag = 'scoped memory for tpu_custom_call.1']
    #allocation5 [shape = 'u8[4096]{0}', space=vmem, size = 0x1000, scoped, tag = 'output window, operand 0, single buffered']
    %6 = vsyncpa [#allocation3], 0
    %7 = vsyncpa [#allocation4], 0
    // Predicated region
    $region2: #{tpu_custom_call.1} parent=1 // pred_check
      _
    $region3: #{tpu_custom_call.1} parent=1 // pred_check_branch
      %9 = sbr.rel (0) target = $region5
    $region4: #{tpu_custom_call.1} parent=1 // pred_region
      %s11 = ssub.s32 128, 128
      %12 = vsyncadd [#allocation3], %s11
      %s14 = sshll.u32 [#allocation2], 4
      %s15 = int_to_ptr.vmem [resolvable:$true] %s14
      %17 = dma.hbm_to_vmem [thread:$0]  %s0, 128, %s15, [#allocation3]
    $region5: #{tpu_custom_call.1} parent=1 // pred_fallthru
      _
    // Predicated region
    $region6: #{tpu_custom_call.1} parent=1 // pred_check
      _
    $region7: #{tpu_custom_call.1} parent=1 // pred_check_branch
      %19 = sbr.rel (0) target = $region9
    $region8: #{tpu_custom_call.1} parent=1 // pred_region
      %20 = dma.done [#allocation3], 128
    $region9: #{tpu_custom_call.1} parent=1 // pred_fallthru
      _
    %v21 = vld [vmem:[#allocation2] sm:$0xff]
    %v22 = vmul.f32 %v21, %v21
    %v23 = vsub.f32 %v22, 1.0
    %24 = vst [vmem:[#allocation5] sm:$0xff] %v23
    // Predicated region
    $region10: #{tpu_custom_call.1} parent=1 // pred_check
      _
    $region11: #{tpu_custom_call.1} parent=1 // pred_check_branch
      %26 = sbr.rel (0) target = $region13
    $region12: #{tpu_custom_call.1} parent=1 // pred_region
      %s28 = ssub.s32 128, 128
      %29 = vsyncadd [#allocation4], %s28
      %s31 = sshll.u32 [#allocation5], 4
      %s32 = int_to_ptr.vmem [resolvable:$true] %s31
      %34 = dma.vmem_to_hbm [thread:$0]  %s32, 128, %s1, [#allocation4]
    $region13: #{tpu_custom_call.1} parent=1 // pred_fallthru
      _
    // Predicated region
    $region14: #{tpu_custom_call.1} parent=1 // pred_check
      _
    $region15: #{tpu_custom_call.1} parent=1 // pred_check_branch
      %36 = sbr.rel (0) target = $region17
    $region16: #{tpu_custom_call.1} parent=1 // pred_region
      %37 = dma.done [#allocation4], 128
    $region17: #{tpu_custom_call.1} parent=1 // pred_fallthru
      _
    %38 = vsyncpa [#allocation3], 1
    %39 = vsyncpa [#allocation4], 1

</llo_original>
